<compile_context>
chip_gen: v5e
topology: v5e:2x2
jax: 0.10.0
libtpu: 0.0.40
codegen_flags: <defaults>
</compile_context>

<pallas_src>
import math

import jax
import jax.numpy as jnp
from jax.experimental import pallas as pl
from jax.experimental.pallas import tpu as pltpu

_LANES = 128


def cann_kernel(w_ref, b_ref, i1_ref, i3_ref, o_ref):
    # w_ref: (8,) f32 in SMEM (scalar prefetch); b_ref: (1,) f32 in SMEM.
    # i1_ref, i3_ref, o_ref: (tile_m, 128) f32 tiles in VMEM.
    w0, w1, w2, w3 = w_ref[0], w_ref[1], w_ref[2], w_ref[3]
    w4, w5, w6, w7 = w_ref[4], w_ref[5], w_ref[6], w_ref[7]
    # Fold the "-1" of every exp(x)-1 feature into the bias (scalar path, free):
    #   sum_j w_j*(exp(.)-1) = sum_j w_j*exp(.) - (w1+w3+w5+w7)
    b = b_ref[0] - (w1 + w3 + w5 + w7)

    x1 = i1_ref[...] - 3.0
    x2 = i3_ref[...] - 1.0
    x1_sq = x1 * x1
    x2_sq = x2 * x2

    # 8 scalar*vector FMAs on the VPU; the 4 exp() go to the EUP slot.
    acc = w0 * x1 + b
    acc += w1 * jnp.exp(x1)
    acc += w2 * x1_sq
    acc += w3 * jnp.exp(x1_sq)
    acc += w4 * x2
    acc += w5 * jnp.exp(x2)
    acc += w6 * x2_sq
    acc += w7 * jnp.exp(x2_sq)

    o_ref[...] = acc


def _pick_tile_m(rows, tile_m_max):
    """Row-block height: big (default up to 2048), multiple of 8, and small
    enough that the grid has >= 2 steps when there is enough work (v7x has two
    TensorCores that only help if the 'parallel' axis has >= 2 steps)."""
    if rows <= 8:
        return rows  # single block equal to the full dim (allowed by tiling rules)
    half = (rows + 1) // 2
    t = min(tile_m_max, ((half + 7) // 8) * 8)
    return max(8, (t // 8) * 8)


def cann_forward(i1, i3, weight, bias, *, tile_m=2048):
    """i1, i3: (N,) float32. weight: (1, 8), bias: (1,). Returns (N, 1) float32."""
    n = i1.shape[0]
    rows = pl.cdiv(n, _LANES)
    n_lane_pad = rows * _LANES

    i1 = i1.astype(jnp.float32)
    i3 = i3.astype(jnp.float32)

    if n_lane_pad == n:
        # Fast path: free reshape of a contiguous buffer, no pad, no output slice.
        i1_2d = i1.reshape(rows, _LANES)
        i3_2d = i3.reshape(rows, _LANES)
    else:
        # Lane-ragged tail: pad by < 128 elements so the 2D view exists.
        # TODO(synk): accept (rows, 128)-shaped caller buffers to make this free too.
        i1_2d = jnp.pad(i1, (0, n_lane_pad - n)).reshape(rows, _LANES)
        i3_2d = jnp.pad(i3, (0, n_lane_pad - n)).reshape(rows, _LANES)

    tm = _pick_tile_m(rows, tile_m)
    grid = (pl.cdiv(rows, tm),)  # last row-block may be partial; Pallas masks it

    w_flat = weight.reshape(8).astype(jnp.float32)
    b_flat = bias.reshape(1).astype(jnp.float32)

    vec_spec = pl.BlockSpec((tm, _LANES), lambda i, w, b: (i, 0))

    out_2d = pl.pallas_call(
        cann_kernel,
        out_shape=jax.ShapeDtypeStruct((rows, _LANES), jnp.float32),
        grid_spec=pltpu.PrefetchScalarGridSpec(
            num_scalar_prefetch=2,          # weight, bias -> SMEM, copied once
            grid=grid,
            in_specs=[vec_spec, vec_spec],
            out_specs=vec_spec,
        ),
        compiler_params=pltpu.CompilerParams(
            dimension_semantics=("parallel",),
            vmem_limit_bytes=32 * 1024 * 1024,
        ),
    )(w_flat, b_flat, i1_2d, i3_2d)

    out_flat = out_2d.reshape(n_lane_pad)
    if n_lane_pad != n:
        out_flat = out_flat[:n]
    return out_flat.reshape(n, 1)


def cann_reference(i1, i3, weight, bias):
    x1 = i1 - 3.0
    x2 = i3 - 1.0
    feats = jnp.stack(
        [
            x1, jnp.exp(x1) - 1.0,
            x1 * x1, jnp.exp(x1 * x1) - 1.0,
            x2, jnp.exp(x2) - 1.0,
            x2 * x2, jnp.exp(x2 * x2) - 1.0,
        ],
        axis=1,
    )  # (N, 8)
    return feats @ weight.T + bias  # (N, 1)


if __name__ == "__main__":
    key = jax.random.PRNGKey(0)
    k_i1, k_i3, k_w, k_b = jax.random.split(key, 4)

    # Deterministic nn.Linear(8, 1)-style init: U(-1/sqrt(8), 1/sqrt(8)).
    bound = 1.0 / math.sqrt(8.0)
    weight = jax.random.uniform(k_w, (1, 8), jnp.float32, -bound, bound)
    bias = jax.random.uniform(k_b, (1,), jnp.float32, -bound, bound)

    cann = jax.jit(cann_forward)

    # N=200 exercises the lane-ragged tail path; N=1024 exercises the
    # zero-copy (no pad / no slice) fast path.
    for n in (200, 1024):
        kk1, kk2 = jax.random.split(jax.random.fold_in(key, n))
        # Invariants of a deformation gradient are near (3, 1); keep values
        # small so exp() stays well-conditioned.
        i1 = 3.0 + 0.5 * jax.random.uniform(kk1, (n,), jnp.float32)
        i3 = 1.0 + 0.5 * jax.random.uniform(kk2, (n,), jnp.float32)

        psi = jax.block_until_ready(cann(i1, i3, weight, bias))
        psi_ref = cann_reference(i1, i3, weight, bias)

        assert psi.shape == (n, 1)
        assert jnp.allclose(psi, psi_ref, rtol=1e-5, atol=1e-5), float(
            jnp.max(jnp.abs(psi - psi_ref))
        )

    print("KERNEL_OK")
</pallas_src>

<mosaic_0001>
module attributes {stable_mosaic.version = 11 : i64} {
  func.func @cann_kernel(%arg0: i32, %arg1: memref<8xf32, #tpu.memory_space<smem>>, %arg2: memref<1xf32, #tpu.memory_space<smem>>, %arg3: memref<2x128xf32, #tpu.memory_space<vmem>>, %arg4: memref<2x128xf32, #tpu.memory_space<vmem>>, %arg5: memref<2x128xf32, #tpu.memory_space<vmem>>) attributes {dimension_semantics = [#tpu.dimension_semantics<parallel>], iteration_bounds = array<i64: 1>, scalar_prefetch = 2 : i64, scratch_operands = 0 : i64, tpu.core_type = #tpu.core_type<tc>, window_params = [{transform_indices = @transform_0, window_bounds = array<i64: 2, 128>}, {transform_indices = @transform_1, window_bounds = array<i64: 2, 128>}, {transform_indices = @transform_2, window_bounds = array<i64: 2, 128>}]} {
    %c0 = arith.constant 0 : index
    %0 = memref.load %arg1[%c0] : memref<8xf32, #tpu.memory_space<smem>>
    %c1 = arith.constant 1 : index
    %1 = memref.load %arg1[%c1] : memref<8xf32, #tpu.memory_space<smem>>
    %c2 = arith.constant 2 : index
    %2 = memref.load %arg1[%c2] : memref<8xf32, #tpu.memory_space<smem>>
    %c3 = arith.constant 3 : index
    %3 = memref.load %arg1[%c3] : memref<8xf32, #tpu.memory_space<smem>>
    %c4 = arith.constant 4 : index
    %4 = memref.load %arg1[%c4] : memref<8xf32, #tpu.memory_space<smem>>
    %c5 = arith.constant 5 : index
    %5 = memref.load %arg1[%c5] : memref<8xf32, #tpu.memory_space<smem>>
    %c6 = arith.constant 6 : index
    %6 = memref.load %arg1[%c6] : memref<8xf32, #tpu.memory_space<smem>>
    %c7 = arith.constant 7 : index
    %7 = memref.load %arg1[%c7] : memref<8xf32, #tpu.memory_space<smem>>
    %c0_0 = arith.constant 0 : index
    %8 = memref.load %arg2[%c0_0] : memref<1xf32, #tpu.memory_space<smem>>
    %9 = arith.addf %1, %3 : f32
    %10 = arith.addf %9, %5 : f32
    %11 = arith.addf %10, %7 : f32
    %12 = arith.subf %8, %11 : f32
    %c0_1 = arith.constant 0 : index
    %c0_2 = arith.constant 0 : index
    %13 = vector.load %arg3[%c0_1, %c0_2] : memref<2x128xf32, #tpu.memory_space<vmem>>, vector<2x128xf32>
    %cst = arith.constant 3.000000e+00 : f32
    %14 = vector.broadcast %cst : f32 to vector<2x128xf32>
    %15 = arith.subf %13, %14 : vector<2x128xf32>
    %c0_3 = arith.constant 0 : index
    %c0_4 = arith.constant 0 : index
    %16 = vector.load %arg4[%c0_3, %c0_4] : memref<2x128xf32, #tpu.memory_space<vmem>>, vector<2x128xf32>
    %cst_5 = arith.constant 1.000000e+00 : f32
    %17 = vector.broadcast %cst_5 : f32 to vector<2x128xf32>
    %18 = arith.subf %16, %17 : vector<2x128xf32>
    %19 = arith.mulf %15, %15 : vector<2x128xf32>
    %20 = arith.mulf %18, %18 : vector<2x128xf32>
    %21 = vector.broadcast %0 : f32 to vector<2x128xf32>
    %22 = arith.mulf %21, %15 : vector<2x128xf32>
    %23 = vector.broadcast %12 : f32 to vector<2x128xf32>
    %24 = arith.addf %22, %23 : vector<2x128xf32>
    %25 = math.exp %15 : vector<2x128xf32>
    %26 = vector.broadcast %1 : f32 to vector<2x128xf32>
    %27 = arith.mulf %26, %25 : vector<2x128xf32>
    %28 = arith.addf %24, %27 : vector<2x128xf32>
    %29 = vector.broadcast %2 : f32 to vector<2x128xf32>
    %30 = arith.mulf %29, %19 : vector<2x128xf32>
    %31 = arith.addf %28, %30 : vector<2x128xf32>
    %32 = math.exp %19 : vector<2x128xf32>
    %33 = vector.broadcast %3 : f32 to vector<2x128xf32>
    %34 = arith.mulf %33, %32 : vector<2x128xf32>
    %35 = arith.addf %31, %34 : vector<2x128xf32>
    %36 = vector.broadcast %4 : f32 to vector<2x128xf32>
    %37 = arith.mulf %36, %18 : vector<2x128xf32>
    %38 = arith.addf %35, %37 : vector<2x128xf32>
    %39 = math.exp %18 : vector<2x128xf32>
    %40 = vector.broadcast %5 : f32 to vector<2x128xf32>
    %41 = arith.mulf %40, %39 : vector<2x128xf32>
    %42 = arith.addf %38, %41 : vector<2x128xf32>
    %43 = vector.broadcast %6 : f32 to vector<2x128xf32>
    %44 = arith.mulf %43, %20 : vector<2x128xf32>
    %45 = arith.addf %42, %44 : vector<2x128xf32>
    %46 = math.exp %20 : vector<2x128xf32>
    %47 = vector.broadcast %7 : f32 to vector<2x128xf32>
    %48 = arith.mulf %47, %46 : vector<2x128xf32>
    %49 = arith.addf %45, %48 : vector<2x128xf32>
    %c0_6 = arith.constant 0 : index
    %c0_7 = arith.constant 0 : index
    %50 = vector.load %arg5[%c0_6, %c0_7] : memref<2x128xf32, #tpu.memory_space<vmem>>, vector<2x128xf32>
    tpu.vector_store %arg5[%c0_6, %c0_7], %49 {strides = array<i32>} : memref<2x128xf32, #tpu.memory_space<vmem>>, vector<2x128xf32>,
    return
  }
  func.func @transform_0(%arg0: i32, %arg1: memref<8xf32, #tpu.memory_space<smem>>, %arg2: memref<1xf32, #tpu.memory_space<smem>>) -> (i32, i32) {
    %c0_i32 = arith.constant 0 : i32
    %c0_i32_0 = arith.constant 0 : i32
    return %arg0, %c0_i32 : i32, i32
  }
  func.func @transform_1(%arg0: i32, %arg1: memref<8xf32, #tpu.memory_space<smem>>, %arg2: memref<1xf32, #tpu.memory_space<smem>>) -> (i32, i32) {
    %c0_i32 = arith.constant 0 : i32
    %c0_i32_0 = arith.constant 0 : i32
    return %arg0, %c0_i32 : i32, i32
  }
  func.func @transform_2(%arg0: i32, %arg1: memref<8xf32, #tpu.memory_space<smem>>, %arg2: memref<1xf32, #tpu.memory_space<smem>>) -> (i32, i32) {
    %c0_i32 = arith.constant 0 : i32
    %c0_i32_0 = arith.constant 0 : i32
    return %arg0, %c0_i32 : i32, i32
  }
}

</mosaic_0001>

<llo_original>
// kernel: cann_forward.1
$region0: #{cann_forward.1}
  #allocation0 [shape = 'u32[]', space=smem, size = 0x4, offset = 0x4, fixed_abs, tag = 'smem constant byte address 0x4 - core index']
  #allocation1 [shape = 'u32[72,128]{1,0:T(1,128)}', space=vmem, size = 0x9000, scoped, tag = 'internal scratch']
  #allocation2 [shape = 's32[1]{0}', space=sflag, size = 0x4, scoped, tag = 'scoped memory for cann_forward.1']
  #allocation3 [shape = 'u8[512]{0}', space=smem, size = 0x200, scoped, tag = 'prefetched SMEM operand 0']
  #allocation4 [shape = 'f32[1]{0:T(128)S(6)}', space=smem, size = 0x200, scoped, tag = 'prefetched SMEM operand 1']
  %s0 = inlined_call_operand.vmem [shape: f32[8], index: 0, kind: input, shape index: {}]
  %s1 = inlined_call_operand.<no memory space> [shape: f32[1], index: 1, kind: input, shape index: {}]
  %s2 = inlined_call_operand.vmem [shape: f32[2,128], index: 2, kind: input, shape index: {}]
  %s3 = inlined_call_operand.vmem [shape: f32[2,128], index: 3, kind: input, shape index: {}]
  %s4 = inlined_call_operand.hbm [shape: f32[2,128], index: 4, kind: output, shape index: {}]
  %s5 = sld [smem:[#allocation0]]
  $region18: #{cann_forward.1} parent=0
    _
  %s7 = ssub.s32 1, %s5
  %s8 = scalar_select 0, %s7, %s5
  %s10 = sshll.u32 %s0, 4
  %s11 = int_to_ptr.vmem [resolvable:$true] %s10
  %13 = dma.vmem_to_smem %s11, 16, [#allocation3], [#allocation2]
  %14 = sst [smem:[#allocation4]] %s1
  %16 = dma.done [#allocation2], 16
  %17 = sfence
  $region1: #{cann_forward.1} parent=0
    #allocation5 [shape = 'u8[1024]{0}', space=vmem, size = 0x400, scoped, tag = 'output window, operand 0, single buffered']
    #allocation6 [shape = 's32[1]{0}', space=sflag, size = 0x4, scoped, tag = 'scoped memory for cann_forward.1']
    %18 = vsyncpa [#allocation6], 0
    // Predicated region
    $region2: #{cann_forward.1} parent=1 // pred_check
      _
    $region3: #{cann_forward.1} parent=1 // pred_check_branch
      %20 = sbr.rel (0) target = $region5
    $region4: #{cann_forward.1} parent=1 // pred_region
      _
    $region5: #{cann_forward.1} parent=1 // pred_fallthru
      _
    // Predicated region
    $region6: #{cann_forward.1} parent=1 // pred_check
      _
    $region7: #{cann_forward.1} parent=1 // pred_check_branch
      %22 = sbr.rel (0) target = $region9
    $region8: #{cann_forward.1} parent=1 // pred_region
      _
    $region9: #{cann_forward.1} parent=1 // pred_fallthru
      _
    %s23 = sld [smem:[#allocation3]]
    %s24 = sld [smem:[#allocation3 + $0x1]]
    %s25 = sld [smem:[#allocation3 + $0x2]]
    %s26 = sld [smem:[#allocation3 + $0x3]]
    %s27 = sld [smem:[#allocation3 + $0x4]]
    %s28 = sld [smem:[#allocation3 + $0x5]]
    %s29 = sld [smem:[#allocation3 + $0x6]]
    %s30 = sld [smem:[#allocation3 + $0x7]]
    %s31 = sld [smem:[#allocation4]]
    %s32 = sadd.f32 %s24, %s26
    %s33 = sadd.f32 %s32, %s28
    %s34 = sadd.f32 %s33, %s30
    %s35 = ssub.f32 %s31, %s34
    %v36 = vld [vmem:[%s2] sm:$0x3]
    %v37 = vsub.f32 %v36, 3.0
    %v38 = vld [vmem:[%s3] sm:$0x3]
    %v39 = vsub.f32 %v38, 1.0
    %v40 = vmul.f32 %v37, %v37
    %v41 = vmul.f32 %v39, %v39
    %v42 = vstv %s23
    %v43 = vmul.f32 %v42, %v37
    %v44 = vstv %s35
    %v45 = vadd.f32 %v43, %v44
    %v46 = vmul.f32 %v37, 1.442695
    %v47 = vpow.pop %v46
    %v48 = vstv %s24
    %v49 = vmul.f32 %v48, %v47
    %v50 = vadd.f32 %v45, %v49
    %v51 = vstv %s25
    %v52 = vmul.f32 %v51, %v40
    %v53 = vadd.f32 %v50, %v52
    %v54 = vmul.f32 %v40, 1.442695
    %v55 = vpow.pop %v54
    %v56 = vstv %s26
    %v57 = vmul.f32 %v56, %v55
    %v58 = vadd.f32 %v53, %v57
    %v59 = vstv %s27
    %v60 = vmul.f32 %v59, %v39
    %v61 = vadd.f32 %v58, %v60
    %v62 = vmul.f32 %v39, 1.442695
    %v63 = vpow.pop %v62
    %v64 = vstv %s28
    %v65 = vmul.f32 %v64, %v63
    %v66 = vadd.f32 %v61, %v65
    %v67 = vstv %s29
    %v68 = vmul.f32 %v67, %v41
    %v69 = vadd.f32 %v66, %v68
    %v70 = vmul.f32 %v41, 1.442695
    %v71 = vpow.pop %v70
    %v72 = vstv %s30
    %v73 = vmul.f32 %v72, %v71
    %v74 = vadd.f32 %v69, %v73
    %75 = vst [vmem:[#allocation5] sm:$0x3] %v74
    // Predicated region
    $region10: #{cann_forward.1} parent=1 // pred_check
      _
    $region11: #{cann_forward.1} parent=1 // pred_check_branch
      %77 = sbr.rel (0) target = $region13
    $region12: #{cann_forward.1} parent=1 // pred_region
      %79 = vsyncadd [#allocation6], 0
      %s81 = sshll.u32 [#allocation5], 4
      %s82 = int_to_ptr.vmem [resolvable:$true] %s81
      %s83 = sshll.u32 %s4, 4
      %s84 = int_to_ptr.hbm [resolvable:$true] %s83
      %86 = dma.vmem_to_hbm [thread:$0]  %s82, 32, %s84, [#allocation6]
    $region13: #{cann_forward.1} parent=1 // pred_fallthru
      _
    // Predicated region
    $region14: #{cann_forward.1} parent=1 // pred_check
      _
    $region15: #{cann_forward.1} parent=1 // pred_check_branch
      %88 = sbr.rel (0) target = $region17
    $region16: #{cann_forward.1} parent=1 // pred_region
      %90 = dma.done [#allocation6], 32
    $region17: #{cann_forward.1} parent=1 // pred_fallthru
      _
    %91 = vsyncpa [#allocation6], 1

</llo_original>
